<compile_context>
chip_gen: v7x
topology: tpu7x:2x2x1
jax: 0.10.0
libtpu: 0.0.40
codegen_flags: <defaults>
</compile_context>

<pallas_src>
import jax
import jax.numpy as jnp
from jax.experimental import pallas as pl
from jax.experimental.pallas import tpu as pltpu


def _lstm_unit_kernel(
    xh_ref,    # (B, in1+in2)
    h_ref,     # (B, in2)
    c_ref,     # (B, out)
    w_ref,     # (in1+in2, 4*out)  packed [I|F|O|x-only-I]
    b_ref,     # (1, 4*out)
    vi_ref,    # (in2, out)
    di_ref,    # (1, out)
    out_ref,   # (B, 2*out)  -> [Ct | hidden]
):
    out = c_ref.shape[1]

    # One lane-dense matmul for all gate pre-activations (+ the reused x@Wi).
    pre = (
        jnp.dot(xh_ref[...], w_ref[...], preferred_element_type=jnp.float32)
        + b_ref[...]
    )  # (B, 4*out)

    # One wide sigmoid over the three gates.
    gates = jax.nn.sigmoid(pre[:, : 3 * out])
    I = gates[:, 0:out]
    F = gates[:, out:2 * out]
    O = gates[:, 2 * out:3 * out]
    xi = pre[:, 3 * out:4 * out]  # x @ Wi + bi (exact, h-rows were zero)

    h = h_ref[...]
    c_prev = c_ref[...]

    # Candidate: sigmoid(Wi(x) + Vi(F * prev_hidden))  (as in the reference).
    cv = (
        jnp.dot(F * h, vi_ref[...], preferred_element_type=jnp.float32)
        + di_ref[...]
    )
    C = jax.nn.sigmoid(xi + cv)

    Ct = F * c_prev + I * C
    hid = O * jnp.tanh(Ct)

    out_ref[...] = jnp.concatenate([Ct, hid], axis=-1)


def pack_params(params):
    """One-time packing of the 6 (w,b) pairs into the kernel's layout.

    params: dict name -> (w_(in,out), b_(out,)). Weights are pre-transposed
    relative to nn.Linear's (out, in) storage.
    """

    def wb(name):
        w, b = params[name]
        return w.astype(jnp.float32), b.astype(jnp.float32)

    wi, bi = wb("Wi")
    vi, di = wb("Vi")
    wf, bf = wb("Wf")
    vf, df = wb("Vf")
    wo, bo = wb("Wo")
    vo, do = wb("Vo")

    in2, out = vi.shape
    zeros_v = jnp.zeros((in2, out), jnp.float32)

    # Column blocks: [I | F | O | x-only-I]; rows: [x-path ; h-path].
    w_all = jnp.concatenate(
        [
            jnp.concatenate([wi, vi], axis=0),
            jnp.concatenate([wf, vf], axis=0),
            jnp.concatenate([wo, vo], axis=0),
            jnp.concatenate([wi, zeros_v], axis=0),
        ],
        axis=1,
    )  # (in1+in2, 4*out)
    b_all = jnp.concatenate([bi + di, bf + df, bo + do, bi]).reshape(1, -1)

    return {
        "W_all": w_all,
        "b_all": b_all,
        "Vi": vi,
        "di": di.reshape(1, -1),
    }


@jax.jit
def lstm_unit_forward(x, prev_hidden, prev_memory, packed):
    x = x.astype(jnp.float32)
    h = prev_hidden.astype(jnp.float32)
    c = prev_memory.astype(jnp.float32)

    B = x.shape[0]
    out = packed["Vi"].shape[1]

    xh = jnp.concatenate([x, h], axis=-1)  # (B, in1+in2)

    vmem = pl.BlockSpec(memory_space=pltpu.MemorySpace.VMEM)

    out_slab = pl.pallas_call(
        _lstm_unit_kernel,
        out_shape=jax.ShapeDtypeStruct((B, 2 * out), jnp.float32),
        in_specs=[vmem] * 7,
        out_specs=vmem,
    )(xh, h, c, packed["W_all"], packed["b_all"], packed["Vi"], packed["di"])

    current_memory = out_slab[:, :out]
    current_hidden = out_slab[:, out:]
    return current_memory, current_hidden


def init_linear(key, in_features, out_features):
    """Deterministic PyTorch-style init: U(-1/sqrt(in), 1/sqrt(in)).
    Weight returned pre-transposed as (in, out)."""
    kw, kb = jax.random.split(key)
    bound = 1.0 / jnp.sqrt(jnp.float32(in_features))
    w = jax.random.uniform(kw, (in_features, out_features), jnp.float32, -bound, bound)
    b = jax.random.uniform(kb, (out_features,), jnp.float32, -bound, bound)
    return w, b


def reference_forward(x, h, c_prev, params):
    def lin(inp, name):
        w, b = params[name]
        return inp @ w + b

    I = jax.nn.sigmoid(lin(x, "Wi") + lin(h, "Vi"))
    F = jax.nn.sigmoid(lin(x, "Wf") + lin(h, "Vf"))
    O = jax.nn.sigmoid(lin(x, "Wo") + lin(h, "Vo"))
    C = jax.nn.sigmoid(lin(x, "Wi") + lin(F * h, "Vi"))
    Ct = F * c_prev + I * C
    return Ct, O * jnp.tanh(Ct)


if __name__ == "__main__":
    B, in1, in2, out = 8, 16, 32, 32  # F * prev_hidden requires in2 == out

    key = jax.random.PRNGKey(0)
    keys = jax.random.split(key, 12)

    params = {
        "Wi": init_linear(keys[0], in1, out),
        "Vi": init_linear(keys[1], in2, out),
        "Wf": init_linear(keys[2], in1, out),
        "Vf": init_linear(keys[3], in2, out),
        "Wo": init_linear(keys[4], in1, out),
        "Vo": init_linear(keys[5], in2, out),
        # Created for parity with __init__, unused in forward (as in the reference).
        "Wc": init_linear(keys[6], in1, out),
        "Vc": init_linear(keys[7], in2, out),
    }

    x = jax.random.normal(keys[8], (B, in1), jnp.float32)
    prev_hidden = jax.random.normal(keys[9], (B, in2), jnp.float32)
    prev_memory = jax.random.normal(keys[10], (B, out), jnp.float32)

    packed = jax.tree_util.tree_map(jnp.asarray, pack_params(params))

    mem, hid = lstm_unit_forward(x, prev_hidden, prev_memory, packed)
    jax.block_until_ready((mem, hid))

    ref_mem, ref_hid = reference_forward(x, prev_hidden, prev_memory, params)
    assert jnp.allclose(mem, ref_mem, atol=1e-5, rtol=1e-5)
    assert jnp.allclose(hid, ref_hid, atol=1e-5, rtol=1e-5)

    print("KERNEL_OK")
</pallas_src>

<mosaic_0001>
module attributes {stable_mosaic.version = 11 : i64} {
  func.func @_lstm_unit_kernel(%arg0: memref<8x48xf32, #tpu.memory_space<vmem>>, %arg1: memref<8x32xf32, #tpu.memory_space<vmem>>, %arg2: memref<8x32xf32, #tpu.memory_space<vmem>>, %arg3: memref<48x128xf32, #tpu.memory_space<vmem>>, %arg4: memref<1x128xf32, #tpu.memory_space<vmem>>, %arg5: memref<32x32xf32, #tpu.memory_space<vmem>>, %arg6: memref<1x32xf32, #tpu.memory_space<vmem>>, %arg7: memref<8x64xf32, #tpu.memory_space<vmem>>) attributes {dimension_semantics = [], scalar_prefetch = 0 : i64, scratch_operands = 0 : i64, tpu.core_type = #tpu.core_type<tc>} {
    %c0 = arith.constant 0 : index
    %c0_0 = arith.constant 0 : index
    %0 = vector.load %arg0[%c0, %c0_0] : memref<8x48xf32, #tpu.memory_space<vmem>>, vector<8x48xf32>
    %c0_1 = arith.constant 0 : index
    %c0_2 = arith.constant 0 : index
    %1 = vector.load %arg3[%c0_1, %c0_2] : memref<48x128xf32, #tpu.memory_space<vmem>>, vector<48x128xf32>
    %cst = arith.constant dense<0.000000e+00> : vector<8x128xf32>
    %2 = tpu.matmul %0, %1, %cst {dimension_numbers = #tpu.dot_dimension_numbers<[1], [0], [0], [1], [0, 0, 1, 1], [], []>} : vector<8x48xf32>, vector<48x128xf32>, vector<8x128xf32> -> vector<8x128xf32>
    %c0_3 = arith.constant 0 : index
    %c0_4 = arith.constant 0 : index
    %3 = vector.load %arg4[%c0_3, %c0_4] : memref<1x128xf32, #tpu.memory_space<vmem>>, vector<1x128xf32>
    %4 = vector.broadcast %3 : vector<1x128xf32> to vector<8x128xf32>
    %5 = arith.addf %2, %4 : vector<8x128xf32>
    %6 = vector.extract_strided_slice %5 {offsets = [0, 0], sizes = [8, 96], strides = [1, 1]} : vector<8x128xf32> to vector<8x96xf32>
    %7 = arith.negf %6 : vector<8x96xf32>
    %8 = math.exp %7 : vector<8x96xf32>
    %cst_5 = arith.constant 1.000000e+00 : f32
    %9 = vector.broadcast %cst_5 : f32 to vector<8x96xf32>
    %10 = arith.addf %9, %8 : vector<8x96xf32>
    %11 = arith.divf %9, %10 : vector<8x96xf32>
    %12 = vector.extract_strided_slice %11 {offsets = [0, 0], sizes = [8, 32], strides = [1, 1]} : vector<8x96xf32> to vector<8x32xf32>
    %13 = vector.extract_strided_slice %11 {offsets = [0, 32], sizes = [8, 32], strides = [1, 1]} : vector<8x96xf32> to vector<8x32xf32>
    %14 = vector.extract_strided_slice %11 {offsets = [0, 64], sizes = [8, 32], strides = [1, 1]} : vector<8x96xf32> to vector<8x32xf32>
    %15 = vector.extract_strided_slice %5 {offsets = [0, 96], sizes = [8, 32], strides = [1, 1]} : vector<8x128xf32> to vector<8x32xf32>
    %c0_6 = arith.constant 0 : index
    %c0_7 = arith.constant 0 : index
    %16 = vector.load %arg1[%c0_6, %c0_7] : memref<8x32xf32, #tpu.memory_space<vmem>>, vector<8x32xf32>
    %c0_8 = arith.constant 0 : index
    %c0_9 = arith.constant 0 : index
    %17 = vector.load %arg2[%c0_8, %c0_9] : memref<8x32xf32, #tpu.memory_space<vmem>>, vector<8x32xf32>
    %18 = arith.mulf %13, %16 : vector<8x32xf32>
    %c0_10 = arith.constant 0 : index
    %c0_11 = arith.constant 0 : index
    %19 = vector.load %arg5[%c0_10, %c0_11] : memref<32x32xf32, #tpu.memory_space<vmem>>, vector<32x32xf32>
    %cst_12 = arith.constant dense<0.000000e+00> : vector<8x32xf32>
    %20 = tpu.matmul %18, %19, %cst_12 {dimension_numbers = #tpu.dot_dimension_numbers<[1], [0], [0], [1], [0, 0, 1, 1], [], []>} : vector<8x32xf32>, vector<32x32xf32>, vector<8x32xf32> -> vector<8x32xf32>
    %c0_13 = arith.constant 0 : index
    %c0_14 = arith.constant 0 : index
    %21 = vector.load %arg6[%c0_13, %c0_14] : memref<1x32xf32, #tpu.memory_space<vmem>>, vector<1x32xf32>
    %22 = vector.broadcast %21 : vector<1x32xf32> to vector<8x32xf32>
    %23 = arith.addf %20, %22 : vector<8x32xf32>
    %24 = arith.addf %15, %23 : vector<8x32xf32>
    %25 = arith.negf %24 : vector<8x32xf32>
    %26 = math.exp %25 : vector<8x32xf32>
    %cst_15 = arith.constant 1.000000e+00 : f32
    %27 = vector.broadcast %cst_15 : f32 to vector<8x32xf32>
    %28 = arith.addf %27, %26 : vector<8x32xf32>
    %29 = arith.divf %27, %28 : vector<8x32xf32>
    %30 = arith.mulf %13, %17 : vector<8x32xf32>
    %31 = arith.mulf %12, %29 : vector<8x32xf32>
    %32 = arith.addf %30, %31 : vector<8x32xf32>
    %33 = math.tanh %32 : vector<8x32xf32>
    %34 = arith.mulf %14, %33 : vector<8x32xf32>
    %35 = tpu.concatenate %32, %34 in 1 : vector<8x32xf32>, vector<8x32xf32> -> vector<8x64xf32>
    %c0_16 = arith.constant 0 : index
    %c0_17 = arith.constant 0 : index
    %36 = vector.load %arg7[%c0_16, %c0_17] : memref<8x64xf32, #tpu.memory_space<vmem>>, vector<8x64xf32>
    tpu.vector_store %arg7[%c0_16, %c0_17], %35 {strides = array<i32>} : memref<8x64xf32, #tpu.memory_space<vmem>>, vector<8x64xf32>,
    return
  }
}

</mosaic_0001>

<llo_original>
// kernel: lstm_unit_forward.1
$region0: #{lstm_unit_forward.1}
  #allocation0 [shape = 'u32[]', space=smem, size = 0x4, offset = 0x4, fixed_abs, tag = 'smem constant byte address 0x4 - core index']
  #allocation1 [shape = 'u32[144,128]{1,0:T(1,128)}', space=vmem, size = 0x12000, scoped, tag = 'internal scratch']
  %s0 = inlined_call_operand.vmem [shape: f32[8,48], index: 0, kind: input, shape index: {}]
  %s1 = inlined_call_operand.vmem [shape: f32[8,32], index: 1, kind: input, shape index: {}]
  %s2 = inlined_call_operand.vmem [shape: f32[8,32], index: 2, kind: input, shape index: {}]
  %s3 = inlined_call_operand.hbm [shape: f32[48,128], index: 3, kind: input, shape index: {}]
  %s4 = inlined_call_operand.vmem [shape: f32[1,128], index: 4, kind: input, shape index: {}]
  %s5 = inlined_call_operand.hbm [shape: f32[32,32], index: 5, kind: input, shape index: {}]
  %s6 = inlined_call_operand.vmem [shape: f32[1,32], index: 6, kind: input, shape index: {}]
  %s7 = inlined_call_operand.vmem [shape: f32[8,64], index: 7, kind: output, shape index: {}]
  %s8 = sld [smem:[#allocation0]]
  $region46: #{lstm_unit_forward.1} parent=0
    _
  %s10 = ssub.s32 1, %s8
  %s11 = scalar_select 0, %s10, %s8
  $region1: #{lstm_unit_forward.1} parent=0
    #allocation2 [shape = 'u8[24576]{0}', space=vmem, size = 0x6000, scoped, tag = 'input window, operand 3, single buffered']
    #allocation3 [shape = 's32[1]{0}', space=sflag, size = 0x4, scoped, tag = 'scoped memory for lstm_unit_forward.1']
    #allocation4 [shape = 'u8[16384]{0}', space=vmem, size = 0x4000, scoped, tag = 'input window, operand 5, single buffered']
    #allocation5 [shape = 's32[1]{0}', space=sflag, size = 0x4, scoped, tag = 'scoped memory for lstm_unit_forward.1']
    %12 = vsyncpa [#allocation3], 0
    %13 = vsyncpa [#allocation5], 0
    // Predicated region
    $region2: #{lstm_unit_forward.1} parent=1 // pred_check
      _
    $region3: #{lstm_unit_forward.1} parent=1 // pred_check_branch
      %15 = sbr.rel (0) target = $region5
    $region4: #{lstm_unit_forward.1} parent=1 // pred_region
      _
    $region5: #{lstm_unit_forward.1} parent=1 // pred_fallthru
      _
    // Predicated region
    $region6: #{lstm_unit_forward.1} parent=1 // pred_check
      _
    $region7: #{lstm_unit_forward.1} parent=1 // pred_check_branch
      %17 = sbr.rel (0) target = $region9
    $region8: #{lstm_unit_forward.1} parent=1 // pred_region
      _
    $region9: #{lstm_unit_forward.1} parent=1 // pred_fallthru
      _
    // Predicated region
    $region10: #{lstm_unit_forward.1} parent=1 // pred_check
      _
    $region11: #{lstm_unit_forward.1} parent=1 // pred_check_branch
      %19 = sbr.rel (0) target = $region13
    $region12: #{lstm_unit_forward.1} parent=1 // pred_region
      _
    $region13: #{lstm_unit_forward.1} parent=1 // pred_fallthru
      _
    // Predicated region
    $region14: #{lstm_unit_forward.1} parent=1 // pred_check
      _
    $region15: #{lstm_unit_forward.1} parent=1 // pred_check_branch
      %21 = sbr.rel (0) target = $region17
    $region16: #{lstm_unit_forward.1} parent=1 // pred_region
      %s23 = ssub.s32 768, 768
      %24 = vsyncadd [#allocation3], %s23
      %s25 = sshll.u32 [#allocation2], 4
      %s26 = int_to_ptr.vmem [resolvable:$true] %s25
      %31 = dma.hbm_to_vmem [thread:$0]  %s3, 768, %s26, [#allocation3], 128, 128, 8
    $region17: #{lstm_unit_forward.1} parent=1 // pred_fallthru
      _
    // Predicated region
    $region18: #{lstm_unit_forward.1} parent=1 // pred_check
      _
    $region19: #{lstm_unit_forward.1} parent=1 // pred_check_branch
      %33 = sbr.rel (0) target = $region21
    $region20: #{lstm_unit_forward.1} parent=1 // pred_region
      _
    $region21: #{lstm_unit_forward.1} parent=1 // pred_fallthru
      _
    // Predicated region
    $region22: #{lstm_unit_forward.1} parent=1 // pred_check
      _
    $region23: #{lstm_unit_forward.1} parent=1 // pred_check_branch
      %35 = sbr.rel (0) target = $region25
    $region24: #{lstm_unit_forward.1} parent=1 // pred_region
      %s37 = ssub.s32 512, 512
      %38 = vsyncadd [#allocation5], %s37
      %s39 = sshll.u32 [#allocation4], 4
      %s40 = int_to_ptr.vmem [resolvable:$true] %s39
      %45 = dma.hbm_to_vmem [thread:$0]  %s5, 512, %s40, [#allocation5], 128, 128, 8
    $region25: #{lstm_unit_forward.1} parent=1 // pred_fallthru
      _
    // Predicated region
    $region26: #{lstm_unit_forward.1} parent=1 // pred_check
      _
    $region27: #{lstm_unit_forward.1} parent=1 // pred_check_branch
      %47 = sbr.rel (0) target = $region29
    $region28: #{lstm_unit_forward.1} parent=1 // pred_region
      _
    $region29: #{lstm_unit_forward.1} parent=1 // pred_fallthru
      _
    // Predicated region
    $region30: #{lstm_unit_forward.1} parent=1 // pred_check
      _
    $region31: #{lstm_unit_forward.1} parent=1 // pred_check_branch
      %49 = sbr.rel (0) target = $region33
    $region32: #{lstm_unit_forward.1} parent=1 // pred_region
      %50 = dma.done [#allocation3], 768
    $region33: #{lstm_unit_forward.1} parent=1 // pred_fallthru
      _
    // Predicated region
    $region34: #{lstm_unit_forward.1} parent=1 // pred_check
      _
    $region35: #{lstm_unit_forward.1} parent=1 // pred_check_branch
      %52 = sbr.rel (0) target = $region37
    $region36: #{lstm_unit_forward.1} parent=1 // pred_region
      %53 = dma.done [#allocation5], 512
    $region37: #{lstm_unit_forward.1} parent=1 // pred_fallthru
      _
    %v54 = vld [vmem:[%s0] sm:$0xff]
    %v55 = vld [vmem:[#allocation2] sm:$0xff]
    %v56 = vld [vmem:[#allocation2 + $0x8] sm:$0xff]
    %v57 = vld [vmem:[#allocation2 + $0x10] sm:$0xff]
    %v58 = vld [vmem:[#allocation2 + $0x18] sm:$0xff]
    %v59 = vld [vmem:[#allocation2 + $0x20] sm:$0xff]
    %v60 = vld [vmem:[#allocation2 + $0x28] sm:$0xff]
    %v61 = vld [vmem:[%s4] sm:$0x1]
    %v63 = vlaneseq
    %v64 = vshrl.u32 %v63, 7
    %v65 = vsub.s32 0, %v64
    %v66 = vrot.slane %v61, %v65
    %vm68 = vcmask 392192
    %v70 = vsel %vm68, %v54, 0
    %72 = vmatprep.subr.mxu0 0.0
    %73 = vmatpush1.msra.mxu0 %v55
    %74 = vmatprep.subr.mxu0 0.0
    %75 = vmatpush1.msra.mxu0 %v56
    %76 = vmatprep.subr.mxu0 0.0
    %77 = vmatpush1.msra.mxu0 %v57
    %78 = vmatprep.subr.mxu0 0.0
    %79 = vmatpush1.msra.mxu0 %v58
    %80 = vmatprep.subr.mxu0 0.0
    %81 = vmatpush1.msra.mxu0 %v59
    %82 = vmatprep.subr.mxu0 0.0
    %83 = vmatpush1.msra.mxu0 %v60
    %84 = vmatprep.subr.mxu0 0.0
    %85 = vmatpush1.msra.mxu0 0.0
    %86 = vmatprep.subr.mxu0 0.0
    %87 = vmatpush1.msra.mxu0 0.0
    %88 = vmatprep.subr.mxu0 0.0
    %89 = vmatpush1.msra.mxu0 0.0
    %90 = vmatprep.subr.mxu0 0.0
    %91 = vmatpush1.msra.mxu0 0.0
    %92 = vmatprep.subr.mxu0 0.0
    %93 = vmatpush1.msra.mxu0 0.0
    %94 = vmatprep.subr.mxu0 0.0
    %95 = vmatpush1.msra.mxu0 0.0
    %96 = vmatprep.subr.mxu0 0.0
    %97 = vmatpush1.msra.mxu0 0.0
    %98 = vmatprep.subr.mxu0 0.0
    %99 = vmatpush1.msra.mxu0 0.0
    %100 = vmatprep.subr.mxu0 0.0
    %101 = vmatpush1.msra.mxu0 0.0
    %102 = vmatprep.subr.mxu0 0.0
    %103 = vmatpush1.msra.mxu0 0.0
    %104 = vmatprep.subr.mxu0 0.0
    %105 = vmatpush1.msra.mxu0 0.0
    %106 = vmatprep.subr.mxu0 0.0
    %107 = vmatpush1.msra.mxu0 0.0
    %108 = vmatprep.subr.mxu0 0.0
    %109 = vmatpush1.msra.mxu0 0.0
    %110 = vmatprep.subr.mxu0 0.0
    %111 = vmatpush1.msra.mxu0 0.0
    %112 = vmatprep.subr.mxu0 0.0
    %113 = vmatpush1.msra.mxu0 0.0
    %114 = vmatprep.subr.mxu0 0.0
    %115 = vmatpush1.msra.mxu0 0.0
    %116 = vmatprep.subr.mxu0 0.0
    %117 = vmatpush1.msra.mxu0 0.0
    %118 = vmatprep.subr.mxu0 0.0
    %119 = vmatpush1.msra.mxu0 0.0
    %120 = vmatprep.subr.mxu0 0.0
    %121 = vmatpush1.msra.mxu0 0.0
    %122 = vmatprep.subr.mxu0 0.0
    %123 = vmatpush1.msra.mxu0 0.0
    %124 = vmatprep.subr.mxu0 0.0
    %125 = vmatpush1.msra.mxu0 0.0
    %126 = vmatprep.subr.mxu0 0.0
    %127 = vmatpush1.msra.mxu0 0.0
    %128 = vmatprep.subr.mxu0 0.0
    %129 = vmatpush1.msra.mxu0 0.0
    %130 = vmatprep.subr.mxu0 0.0
    %131 = vmatpush1.msra.mxu0 0.0
    %132 = vmatprep.subr.mxu0 0.0
    %133 = vmatpush1.msra.mxu0 0.0
    %134 = vmatprep.subr.mxu0 0.0
    %135 = vmatpush1.msra.mxu0 0.0
    %136 = vmatprep.mubr.f32.mxu0 0.0
    %137 = vmatmul.mubr.f32.gmra.mrb[0].mxu0 %v70
    %v138 = vpop.f32.mrb[0].mxu0
    %v139 = vadd.f32 %v66, %v138
    %v140 = vpop.f32.mrb[0].mxu0
    %141 = vdwg.mxu0
    %v142 = vxor.u32 %v139, 2147483648
    %v143 = vmul.f32 %v142, 1.442695
    %v144 = vpow.pop %v143
    %v145 = vadd.f32 %v144, 1.0
    %v146 = vrcp.pop %v145
    %v147 = vmul.f32 1.0, %v146
    %v148 = vld [vmem:[%s1] sm:$0xff]
    %v149 = vld [vmem:[%s2] sm:$0xff]
    %151 = vrot.lane.b32.xlu0 %v148, 32
    %v152 = vpop.permute.xlu0 %151
    %v154 = vmul.f32 %v147, %v152
    %v155 = vld [vmem:[#allocation4] sm:$0xff]
    %v156 = vld [vmem:[#allocation4 + $0x8] sm:$0xff]
    %v157 = vld [vmem:[#allocation4 + $0x10] sm:$0xff]
    %v158 = vld [vmem:[#allocation4 + $0x18] sm:$0xff]
    %v159 = vld [vmem:[%s6] sm:$0x1]
    %v161 = vlaneseq
    %v162 = vshrl.u32 %v161, 7
    %v163 = vsub.s32 0, %v162
    %v164 = vrot.slane %v159, %v163
    %167 = vrot.lane.b32.xlu0 %v154, 96
    %v168 = vpop.permute.xlu0 %167
    %vm169 = vcmask 261120
    %v170 = vsel %vm169, %v168, 0
    %172 = vmatprep.subr.mxu0 0.0
    %173 = vmatpush1.msra.mxu0 %v155
    %174 = vmatprep.subr.mxu0 0.0
    %175 = vmatpush1.msra.mxu0 %v156
    %176 = vmatprep.subr.mxu0 0.0
    %177 = vmatpush1.msra.mxu0 %v157
    %178 = vmatprep.subr.mxu0 0.0
    %179 = vmatpush1.msra.mxu0 %v158
    %180 = vmatprep.subr.mxu0 0.0
    %181 = vmatpush1.msra.mxu0 0.0
    %182 = vmatprep.subr.mxu0 0.0
    %183 = vmatpush1.msra.mxu0 0.0
    %184 = vmatprep.subr.mxu0 0.0
    %185 = vmatpush1.msra.mxu0 0.0
    %186 = vmatprep.subr.mxu0 0.0
    %187 = vmatpush1.msra.mxu0 0.0
    %188 = vmatprep.subr.mxu0 0.0
    %189 = vmatpush1.msra.mxu0 0.0
    %190 = vmatprep.subr.mxu0 0.0
    %191 = vmatpush1.msra.mxu0 0.0
    %192 = vmatprep.subr.mxu0 0.0
    %193 = vmatpush1.msra.mxu0 0.0
    %194 = vmatprep.subr.mxu0 0.0
    %195 = vmatpush1.msra.mxu0 0.0
    %196 = vmatprep.subr.mxu0 0.0
    %197 = vmatpush1.msra.mxu0 0.0
    %198 = vmatprep.subr.mxu0 0.0
    %199 = vmatpush1.msra.mxu0 0.0
    %200 = vmatprep.subr.mxu0 0.0
    %201 = vmatpush1.msra.mxu0 0.0
    %202 = vmatprep.subr.mxu0 0.0
    %203 = vmatpush1.msra.mxu0 0.0
    %204 = vmatprep.subr.mxu0 0.0
    %205 = vmatpush1.msra.mxu0 0.0
    %206 = vmatprep.subr.mxu0 0.0
    %207 = vmatpush1.msra.mxu0 0.0
    %208 = vmatprep.subr.mxu0 0.0
    %209 = vmatpush1.msra.mxu0 0.0
    %210 = vmatprep.subr.mxu0 0.0
    %211 = vmatpush1.msra.mxu0 0.0
    %212 = vmatprep.subr.mxu0 0.0
    %213 = vmatpush1.msra.mxu0 0.0
    %214 = vmatprep.subr.mxu0 0.0
    %215 = vmatpush1.msra.mxu0 0.0
    %216 = vmatprep.subr.mxu0 0.0
    %217 = vmatpush1.msra.mxu0 0.0
    %218 = vmatprep.subr.mxu0 0.0
    %219 = vmatpush1.msra.mxu0 0.0
    %220 = vmatprep.subr.mxu0 0.0
    %221 = vmatpush1.msra.mxu0 0.0
    %222 = vmatprep.subr.mxu0 0.0
    %223 = vmatpush1.msra.mxu0 0.0
    %224 = vmatprep.subr.mxu0 0.0
    %225 = vmatpush1.msra.mxu0 0.0
    %226 = vmatprep.subr.mxu0 0.0
    %227 = vmatpush1.msra.mxu0 0.0
    %228 = vmatprep.subr.mxu0 0.0
    %229 = vmatpush1.msra.mxu0 0.0
    %230 = vmatprep.subr.mxu0 0.0
    %231 = vmatpush1.msra.mxu0 0.0
    %232 = vmatprep.subr.mxu0 0.0
    %233 = vmatpush1.msra.mxu0 0.0
    %234 = vmatprep.subr.mxu0 0.0
    %235 = vmatpush1.msra.mxu0 0.0
    %236 = vmatprep.mubr.f32.mxu0 0.0
    %237 = vmatmul.mubr.f32.gmra.mrb[0].mxu0 %v170
    %v238 = vpop.f32.mrb[0].mxu0
    %v239 = vadd.f32 %v164, %v238
    %v240 = vpop.f32.mrb[0].mxu0
    %241 = vdwg.mxu0
    %243 = vrot.lane.b32.xlu0 %v239, 96
    %v244 = vpop.permute.xlu0 %243
    %v246 = vadd.f32 %v139, %v244
    %v247 = vxor.u32 %v246, 2147483648
    %v248 = vmul.f32 %v247, 1.442695
    %v249 = vpow.pop %v248
    %v250 = vadd.f32 %v249, 1.0
    %v251 = vrcp.pop %v250
    %v252 = vmul.f32 1.0, %v251
    %254 = vrot.lane.b32.xlu0 %v149, 32
    %v255 = vpop.permute.xlu0 %254
    %v257 = vmul.f32 %v147, %v255
    %259 = vrot.lane.b32.xlu0 %v252, 32
    %v260 = vpop.permute.xlu0 %259
    %v262 = vmul.f32 %v147, %v260
    %264 = vrot.lane.b32.xlu0 %v262, 32
    %v265 = vpop.permute.xlu0 %264
    %v267 = vadd.f32 %v257, %v265
    %v268 = vtanh.pop %v267
    %270 = vrot.lane.b32.xlu0 %v268, 32
    %v271 = vpop.permute.xlu0 %270
    %v273 = vmul.f32 %v147, %v271
    %275 = vrot.lane.b32.xlu0 %v267, 96
    %v276 = vpop.permute.xlu0 %275
    %279 = vrot.lane.b32.xlu0 %v273, 96
    %v280 = vpop.permute.xlu0 %279
    %v282 = vsel %vm169, %v276, %v280
    %vm283 = vcmask 523264
    %284 = vst.msk [vmem:[%s7] sm:$0xff] %vm283, %v282
    // Predicated region
    $region38: #{lstm_unit_forward.1} parent=1 // pred_check
      _
    $region39: #{lstm_unit_forward.1} parent=1 // pred_check_branch
      %286 = sbr.rel (0) target = $region41
    $region40: #{lstm_unit_forward.1} parent=1 // pred_region
      _
    $region41: #{lstm_unit_forward.1} parent=1 // pred_fallthru
      _
    // Predicated region
    $region42: #{lstm_unit_forward.1} parent=1 // pred_check
      _
    $region43: #{lstm_unit_forward.1} parent=1 // pred_check_branch
      %288 = sbr.rel (0) target = $region45
    $region44: #{lstm_unit_forward.1} parent=1 // pred_region
      _
    $region45: #{lstm_unit_forward.1} parent=1 // pred_fallthru
      _
    %289 = vsyncpa [#allocation3], 1
    %290 = vsyncpa [#allocation5], 1

</llo_original>
